<compile_context>
chip_gen: v7x
topology: tpu7x:2x2x1
jax: 0.10.0
libtpu: 0.0.40
codegen_flags: <defaults>
</compile_context>

<pallas_src>
import jax
import jax.numpy as jnp
from jax.experimental import pallas as pl
from jax.experimental.pallas import tpu as pltpu

# ----------------------------- configuration --------------------------------
B = 2          # batch
C_IN = 4       # last_block_channel
C0 = 8         # channels[0]
C1 = 16        # channels[1]
CE = 2         # end_channel
T = 8          # input time steps
V = 16         # n_vertex
KT = 3         # Ko (temporal kernel size)
T_OUT = T - KT + 1
N = B * T_OUT * V          # 192  -> lane axis everywhere in-kernel
NG = B * T_OUT             # 12 LayerNorm groups, each [V, C0] = 128 elements
K_AUG = KT * C_IN + 1      # 13 im2col taps + ones row (carries the conv bias)
EPS = 1e-12                # matches nn.LayerNorm(..., eps=1e-12)
# act_func='glu', bias=True, droprate ignored (eval-mode dropout = identity)

# ------------------ packed constant slab (cw) row offsets --------------------
R_GAM = 0                  # (C0, N)  LN gamma, transposed + tiled over groups
R_BET = R_GAM + C0         # (C0, N)  LN beta
R_B1  = R_BET + C0         # (C1, N)  fc1 bias, pre-broadcast over lanes
R_G   = R_B1 + C1          # (NG, N)  0/1 group -> column broadcast matrix
R_B2  = R_G + NG           # (CE, N)  fc2 bias, pre-broadcast over lanes
R_W2  = R_B2 + CE          # (CE, C1) fc2 weight^T  (cols 0:C1)
R_W   = R_W2 + CE          # rows R_W:R_W+16 hold conv weight^T (cols 0:K_AUG)
                           #   and fc1 weight^T (cols K_AUG:K_AUG+C0)
CW_ROWS = R_W + max(2 * C0, C1)     # 64


# ------------------------------- kernel -------------------------------------
def output_block_kernel(x_ref, gt_ref, cw_ref, o_ref):
    # x_ref : (K_AUG, N) = (13, 192)  im2col'ed conv taps^T + ones row (bias)
    # gt_ref: (N, NG)    = (192, 12)  0/1 group-membership (LN group sums)
    # cw_ref: (64, N)                 packed static constants (see prepare_params)
    # o_ref : (CE, N)    = (2, 192)   lane-dense output slab
    cw = cw_ref[...]
    gam_t = cw[R_GAM:R_GAM + C0, :]                 # (C0, N)
    bet_t = cw[R_BET:R_BET + C0, :]                 # (C0, N)
    b1_b  = cw[R_B1:R_B1 + C1, :]                   # (C1, N)
    g_mat = cw[R_G:R_G + NG, :]                     # (NG, N)
    b2_b  = cw[R_B2:R_B2 + CE, :]                   # (CE, N)
    w2_t  = cw[R_W2:R_W2 + CE, 0:C1]                # (CE, C1)
    wc_t  = cw[R_W:R_W + 2 * C0, 0:K_AUG]           # (2*C0, K_AUG)
    w1_t  = cw[R_W:R_W + C1, K_AUG:K_AUG + C0]      # (C1, C0)

    # --- causal conv (+bias) + Align residual (folded into p-half weights) ---
    conv = jnp.dot(wc_t, x_ref[...], preferred_element_type=jnp.float32)  # (2*C0, N)

    # --- GLU gating -----------------------------------------------------------
    z = conv[0:C0, :] * jax.nn.sigmoid(conv[C0:2 * C0, :])                # (C0, N)

    # --- LayerNorm over each [V, C0] group (V consecutive columns, all rows) --
    # one-pass mean/var via a single group-sum matmul over [z ; z*z]
    zz = jnp.concatenate([z, z * z], axis=0)                              # (2*C0, N)
    s = jnp.dot(zz, gt_ref[...], preferred_element_type=jnp.float32)      # (2*C0, NG)
    inv = 1.0 / (V * C0)
    mean = jnp.sum(s[0:C0, :], axis=0, keepdims=True) * inv               # (1, NG)
    ex2  = jnp.sum(s[C0:2 * C0, :], axis=0, keepdims=True) * inv          # (1, NG)
    rstd = jax.lax.rsqrt(ex2 - mean * mean + EPS)                         # (1, NG)
    mr = jnp.concatenate([mean, rstd], axis=0)                            # (2, NG)
    bc = jnp.dot(mr, g_mat, preferred_element_type=jnp.float32)           # (2, N)
    zn = (z - bc[0:1, :]) * bc[1:2, :] * gam_t + bet_t                    # (C0, N)

    # --- fc1 + ReLU + (dropout = identity) + fc2 ------------------------------
    # TODO(synk): nn.Dropout is stochastic only in training; inference is identity.
    h = jnp.maximum(
        jnp.dot(w1_t, zn, preferred_element_type=jnp.float32) + b1_b, 0.0)  # (C1, N)
    o_ref[...] = jnp.dot(w2_t, h, preferred_element_type=jnp.float32) + b2_b  # (CE, N)


# ---------------------- one-time static operand packing ----------------------
def prepare_params(params):
    """Pack all static operands into (gt, cw); call once, reuse every step."""
    wc, bc_, aal, bal, g, bt, w1, b1, w2, b2 = params

    # Fold the Align residual (+ its bias) into the last conv tap's p-half.
    wc_f = wc.at[KT - 1, :, :C0].add(aal)                    # (KT, C_IN, 2*C0)
    bc_f = bc_.at[:, :C0].add(bal)                           # (1, 2*C0)
    w_aug = jnp.concatenate([wc_f.reshape(KT * C_IN, 2 * C0), bc_f], axis=0)  # (K_AUG, 2*C0)

    # LN group matrices: column n of z belongs to group n // V.
    grp = jnp.arange(N) // V
    G = (jnp.arange(NG)[:, None] == grp[None, :]).astype(jnp.float32)     # (NG, N)

    # LN affine, transposed + tiled over groups: [c, n] -> param[n % V, c].
    gam_t = jnp.tile(g.T, (1, NG))                           # (C0, N)
    bet_t = jnp.tile(bt.T, (1, NG))                          # (C0, N)

    cw = jnp.zeros((CW_ROWS, N), jnp.float32)
    cw = cw.at[R_GAM:R_GAM + C0, :].set(gam_t)
    cw = cw.at[R_BET:R_BET + C0, :].set(bet_t)
    cw = cw.at[R_B1:R_B1 + C1, :].set(jnp.broadcast_to(b1.reshape(C1, 1), (C1, N)))
    cw = cw.at[R_G:R_G + NG, :].set(G)
    cw = cw.at[R_B2:R_B2 + CE, :].set(jnp.broadcast_to(b2.reshape(CE, 1), (CE, N)))
    cw = cw.at[R_W2:R_W2 + CE, 0:C1].set(w2.T)
    cw = cw.at[R_W:R_W + 2 * C0, 0:K_AUG].set(w_aug.T)
    cw = cw.at[R_W:R_W + C1, K_AUG:K_AUG + C0].set(w1.T)
    return G.T, cw                                           # gt (N, NG), cw (64, N)


# ------------------------------- wrapper -------------------------------------
_VMEM = pl.BlockSpec(memory_space=pltpu.MemorySpace.VMEM)

_COST = pl.CostEstimate(
    flops=2 * (2 * C0 * K_AUG * N        # conv
               + 2 * C0 * N * NG         # LN group sums
               + 2 * NG * N              # LN broadcast
               + C1 * C0 * N             # fc1
               + CE * C1 * N),           # fc2
    transcendentals=C0 * N + NG,         # sigmoid + rsqrt
    bytes_accessed=4 * (K_AUG * N + N * NG + CW_ROWS * N + CE * N),
)


@jax.jit
def output_block(x_nchw, gt, cw):
    """x_nchw: (B, C_IN, T, V) f32 (PyTorch NCHW). Returns (B, CE, T_OUT, V)."""
    # im2col the KT taps and transpose so N is the lane axis; ones row = bias.
    x = jnp.transpose(x_nchw, (0, 2, 3, 1))                              # (B, T, V, C_IN)
    taps = jnp.stack([x[:, kt:kt + T_OUT] for kt in range(KT)], axis=3)  # (B,T_OUT,V,KT,C_IN)
    x_t = taps.reshape(N, KT * C_IN).T                                   # (KT*C_IN, N)
    x_aug = jnp.concatenate([x_t, jnp.ones((1, N), jnp.float32)], axis=0)  # (K_AUG, N)

    out = pl.pallas_call(
        output_block_kernel,
        out_shape=jax.ShapeDtypeStruct((CE, N), jnp.float32),
        in_specs=[_VMEM, _VMEM, _VMEM],
        out_specs=_VMEM,
        cost_estimate=_COST,
    )(x_aug, gt, cw)

    # (CE, N) -> (CE, B, T_OUT, V) -> (B, CE, T_OUT, V)
    return jnp.transpose(out.reshape(CE, B, T_OUT, V), (1, 0, 2, 3))


# --------------------------- pure-JAX reference ------------------------------
def reference(x_nchw, wc, bc, aal, bal, g, bt, w1, b1, w2, b2):
    x = jnp.transpose(x_nchw, (0, 2, 3, 1))            # (B, T, V, C_IN)
    conv = jnp.zeros((B, T_OUT, V, 2 * C0), jnp.float32) + bc
    for kt in range(KT):
        conv = conv + jnp.einsum('btvc,cd->btvd', x[:, kt:kt + T_OUT], wc[kt])
    x_in = jnp.einsum('btvc,cd->btvd', x[:, KT - 1:], aal) + bal
    z = (conv[..., :C0] + x_in) * jax.nn.sigmoid(conv[..., C0:])
    m = jnp.mean(z, axis=(2, 3), keepdims=True)
    var = jnp.mean((z - m) ** 2, axis=(2, 3), keepdims=True)
    zn = (z - m) / jnp.sqrt(var + EPS) * g + bt
    h = jnp.maximum(zn @ w1 + b1, 0.0)
    out = h @ w2 + b2
    return jnp.transpose(out, (0, 3, 1, 2))


# --------------------------------- main --------------------------------------
if __name__ == "__main__":
    key = jax.random.PRNGKey(0)
    keys = jax.random.split(key, 9)

    # input, PyTorch NCHW: (B, last_block_channel, T, n_vertex)
    x = jax.random.normal(keys[0], (B, C_IN, T, V), jnp.float32)

    # CausalConv2d(c_in=C_IN, c_out=2*C0, kernel=(KT,1)):
    # PyTorch weight (2*C0, C_IN, KT, 1) -> per-tap (KT, C_IN, 2*C0) matmul weights.
    w_conv = jax.random.normal(keys[1], (2 * C0, C_IN, KT, 1), jnp.float32) * 0.2
    wc = jnp.transpose(w_conv[..., 0], (2, 1, 0))             # (KT, C_IN, 2*C0)
    bc = (jax.random.normal(keys[2], (2 * C0,), jnp.float32) * 0.1).reshape(1, -1)

    # Align: C_IN < C0 -> zero-pad channels == matmul with [I ; 0], zero bias.
    aal = jnp.eye(C_IN, C0, dtype=jnp.float32)
    bal = jnp.zeros((1, C0), jnp.float32)

    # LayerNorm([n_vertex, channels[0]]) affine params.
    g = 1.0 + 0.1 * jax.random.normal(keys[3], (V, C0), jnp.float32)
    bt = 0.1 * jax.random.normal(keys[4], (V, C0), jnp.float32)

    # fc1 / fc2 (stored pre-transposed: y = x @ W + b).
    w1 = jax.random.normal(keys[5], (C0, C1), jnp.float32) * 0.2
    b1 = (jax.random.normal(keys[6], (C1,), jnp.float32) * 0.1).reshape(1, -1)
    w2 = jax.random.normal(keys[7], (C1, CE), jnp.float32) * 0.2
    b2 = (jax.random.normal(keys[8], (CE,), jnp.float32) * 0.1).reshape(1, -1)

    params = (wc, bc, aal, bal, g, bt, w1, b1, w2, b2)

    gt, cw = prepare_params(params)          # one-time static operand packing
    y = jax.block_until_ready(output_block(x, gt, cw))

    y_ref = reference(x, *params)
    assert y.shape == (B, CE, T_OUT, V), y.shape
    err = float(jnp.max(jnp.abs(y - y_ref)))
    assert jnp.allclose(y, y_ref, atol=2e-4, rtol=2e-4), err

    print("KERNEL_OK")
</pallas_src>

<mosaic_0001>
module attributes {stable_mosaic.version = 11 : i64} {
  func.func @output_block_kernel(%arg0: memref<13x192xf32, #tpu.memory_space<vmem>>, %arg1: memref<192x12xf32, #tpu.memory_space<vmem>>, %arg2: memref<64x192xf32, #tpu.memory_space<vmem>>, %arg3: memref<2x192xf32, #tpu.memory_space<vmem>>) attributes {dimension_semantics = [], scalar_prefetch = 0 : i64, scratch_operands = 0 : i64, tpu.core_type = #tpu.core_type<tc>} {
    %c0 = arith.constant 0 : index
    %c0_0 = arith.constant 0 : index
    %0 = vector.load %arg2[%c0, %c0_0] : memref<64x192xf32, #tpu.memory_space<vmem>>, vector<64x192xf32>
    %1 = vector.extract_strided_slice %0 {offsets = [0, 0], sizes = [8, 192], strides = [1, 1]} : vector<64x192xf32> to vector<8x192xf32>
    %2 = vector.extract_strided_slice %0 {offsets = [8, 0], sizes = [8, 192], strides = [1, 1]} : vector<64x192xf32> to vector<8x192xf32>
    %3 = vector.extract_strided_slice %0 {offsets = [16, 0], sizes = [16, 192], strides = [1, 1]} : vector<64x192xf32> to vector<16x192xf32>
    %4 = vector.extract_strided_slice %0 {offsets = [32, 0], sizes = [12, 192], strides = [1, 1]} : vector<64x192xf32> to vector<12x192xf32>
    %5 = vector.extract_strided_slice %0 {offsets = [44, 0], sizes = [2, 192], strides = [1, 1]} : vector<64x192xf32> to vector<2x192xf32>
    %6 = vector.extract_strided_slice %0 {offsets = [46, 0], sizes = [2, 16], strides = [1, 1]} : vector<64x192xf32> to vector<2x16xf32>
    %7 = vector.extract_strided_slice %0 {offsets = [48, 0], sizes = [16, 13], strides = [1, 1]} : vector<64x192xf32> to vector<16x13xf32>
    %8 = vector.extract_strided_slice %0 {offsets = [48, 13], sizes = [16, 8], strides = [1, 1]} : vector<64x192xf32> to vector<16x8xf32>
    %c0_1 = arith.constant 0 : index
    %c0_2 = arith.constant 0 : index
    %9 = vector.load %arg0[%c0_1, %c0_2] : memref<13x192xf32, #tpu.memory_space<vmem>>, vector<13x192xf32>
    %cst = arith.constant dense<0.000000e+00> : vector<16x192xf32>
    %10 = tpu.matmul %7, %9, %cst {dimension_numbers = #tpu.dot_dimension_numbers<[1], [0], [0], [1], [0, 0, 1, 1], [], []>} : vector<16x13xf32>, vector<13x192xf32>, vector<16x192xf32> -> vector<16x192xf32>
    %11 = vector.extract_strided_slice %10 {offsets = [0, 0], sizes = [8, 192], strides = [1, 1]} : vector<16x192xf32> to vector<8x192xf32>
    %12 = vector.extract_strided_slice %10 {offsets = [8, 0], sizes = [8, 192], strides = [1, 1]} : vector<16x192xf32> to vector<8x192xf32>
    %13 = arith.negf %12 : vector<8x192xf32>
    %14 = math.exp %13 : vector<8x192xf32>
    %cst_3 = arith.constant 1.000000e+00 : f32
    %15 = vector.broadcast %cst_3 : f32 to vector<8x192xf32>
    %16 = arith.addf %15, %14 : vector<8x192xf32>
    %17 = arith.divf %15, %16 : vector<8x192xf32>
    %18 = arith.mulf %11, %17 : vector<8x192xf32>
    %19 = arith.mulf %18, %18 : vector<8x192xf32>
    %20 = tpu.concatenate %18, %19 in 0 : vector<8x192xf32>, vector<8x192xf32> -> vector<16x192xf32>
    %c0_4 = arith.constant 0 : index
    %c0_5 = arith.constant 0 : index
    %21 = vector.load %arg1[%c0_4, %c0_5] : memref<192x12xf32, #tpu.memory_space<vmem>>, vector<192x12xf32>
    %cst_6 = arith.constant dense<0.000000e+00> : vector<16x12xf32>
    %22 = tpu.matmul %20, %21, %cst_6 {dimension_numbers = #tpu.dot_dimension_numbers<[1], [0], [0], [1], [0, 0, 1, 1], [], []>} : vector<16x192xf32>, vector<192x12xf32>, vector<16x12xf32> -> vector<16x12xf32>
    %23 = vector.extract_strided_slice %22 {offsets = [0, 0], sizes = [8, 12], strides = [1, 1]} : vector<16x12xf32> to vector<8x12xf32>
    %cst_7 = arith.constant dense<0.000000e+00> : vector<12xf32>
    %24 = vector.multi_reduction <add>, %23, %cst_7 [0] : vector<8x12xf32> to vector<12xf32>
    %25 = vector.shape_cast %24 : vector<12xf32> to vector<1x12xf32>
    %cst_8 = arith.constant 7.812500e-03 : f32
    %26 = vector.broadcast %cst_8 : f32 to vector<1x12xf32>
    %27 = arith.mulf %25, %26 : vector<1x12xf32>
    %28 = vector.extract_strided_slice %22 {offsets = [8, 0], sizes = [8, 12], strides = [1, 1]} : vector<16x12xf32> to vector<8x12xf32>
    %cst_9 = arith.constant dense<0.000000e+00> : vector<12xf32>
    %29 = vector.multi_reduction <add>, %28, %cst_9 [0] : vector<8x12xf32> to vector<12xf32>
    %30 = vector.shape_cast %29 : vector<12xf32> to vector<1x12xf32>
    %cst_10 = arith.constant 7.812500e-03 : f32
    %31 = vector.broadcast %cst_10 : f32 to vector<1x12xf32>
    %32 = arith.mulf %30, %31 : vector<1x12xf32>
    %33 = arith.mulf %27, %27 : vector<1x12xf32>
    %34 = arith.subf %32, %33 : vector<1x12xf32>
    %cst_11 = arith.constant 9.99999996E-13 : f32
    %35 = vector.broadcast %cst_11 : f32 to vector<1x12xf32>
    %36 = arith.addf %34, %35 : vector<1x12xf32>
    %37 = math.rsqrt %36 : vector<1x12xf32>
    %38 = tpu.concatenate %27, %37 in 0 : vector<1x12xf32>, vector<1x12xf32> -> vector<2x12xf32>
    %cst_12 = arith.constant dense<0.000000e+00> : vector<2x192xf32>
    %39 = tpu.matmul %38, %4, %cst_12 {dimension_numbers = #tpu.dot_dimension_numbers<[1], [0], [0], [1], [0, 0, 1, 1], [], []>} : vector<2x12xf32>, vector<12x192xf32>, vector<2x192xf32> -> vector<2x192xf32>
    %40 = vector.extract_strided_slice %39 {offsets = [0, 0], sizes = [1, 192], strides = [1, 1]} : vector<2x192xf32> to vector<1x192xf32>
    %41 = vector.broadcast %40 : vector<1x192xf32> to vector<8x192xf32>
    %42 = arith.subf %18, %41 : vector<8x192xf32>
    %43 = vector.extract_strided_slice %39 {offsets = [1, 0], sizes = [1, 192], strides = [1, 1]} : vector<2x192xf32> to vector<1x192xf32>
    %44 = vector.broadcast %43 : vector<1x192xf32> to vector<8x192xf32>
    %45 = arith.mulf %42, %44 : vector<8x192xf32>
    %46 = arith.mulf %45, %1 : vector<8x192xf32>
    %47 = arith.addf %46, %2 : vector<8x192xf32>
    %cst_13 = arith.constant dense<0.000000e+00> : vector<16x192xf32>
    %48 = tpu.matmul %8, %47, %cst_13 {dimension_numbers = #tpu.dot_dimension_numbers<[1], [0], [0], [1], [0, 0, 1, 1], [], []>} : vector<16x8xf32>, vector<8x192xf32>, vector<16x192xf32> -> vector<16x192xf32>
    %49 = arith.addf %48, %3 : vector<16x192xf32>
    %cst_14 = arith.constant 0.000000e+00 : f32
    %50 = vector.broadcast %cst_14 : f32 to vector<16x192xf32>
    %51 = arith.maximumf %49, %50 : vector<16x192xf32>
    %cst_15 = arith.constant dense<0.000000e+00> : vector<2x192xf32>
    %52 = tpu.matmul %6, %51, %cst_15 {dimension_numbers = #tpu.dot_dimension_numbers<[1], [0], [0], [1], [0, 0, 1, 1], [], []>} : vector<2x16xf32>, vector<16x192xf32>, vector<2x192xf32> -> vector<2x192xf32>
    %53 = arith.addf %52, %5 : vector<2x192xf32>
    %c0_16 = arith.constant 0 : index
    %c0_17 = arith.constant 0 : index
    %54 = vector.load %arg3[%c0_16, %c0_17] : memref<2x192xf32, #tpu.memory_space<vmem>>, vector<2x192xf32>
    tpu.vector_store %arg3[%c0_16, %c0_17], %53 {strides = array<i32>} : memref<2x192xf32, #tpu.memory_space<vmem>>, vector<2x192xf32>,
    return
  }
}

</mosaic_0001>

<llo_original>
// kernel: output_block.1
$region0: #{output_block.1}
  #allocation0 [shape = 'u32[]', space=smem, size = 0x4, offset = 0x4, fixed_abs, tag = 'smem constant byte address 0x4 - core index']
  #allocation1 [shape = 'u32[144,128]{1,0:T(1,128)}', space=vmem, size = 0x12000, scoped, tag = 'internal scratch']
  %s0 = inlined_call_operand.vmem [shape: f32[13,192], index: 0, kind: input, shape index: {}]
  %s1 = inlined_call_operand.vmem [shape: f32[192,12], index: 1, kind: input, shape index: {}]
  %s2 = inlined_call_operand.vmem [shape: f32[64,192], index: 2, kind: input, shape index: {}]
  %s3 = inlined_call_operand.vmem [shape: f32[2,192], index: 3, kind: output, shape index: {}]
  %s4 = sld [smem:[#allocation0]]
  $region22: #{output_block.1} parent=0
    _
  %s6 = ssub.s32 1, %s4
  %s7 = scalar_select 0, %s6, %s4
  // Predicated region
  $region2: #{output_block.1} parent=0 // pred_check
    _
  $region3: #{output_block.1} parent=0 // pred_check_branch
    %9 = sbr.rel (0) target = $region5
  $region4: #{output_block.1} parent=0 // pred_region
    _
  $region5: #{output_block.1} parent=0 // pred_fallthru
    _
  // Predicated region
  $region6: #{output_block.1} parent=0 // pred_check
    _
  $region7: #{output_block.1} parent=0 // pred_check_branch
    %11 = sbr.rel (0) target = $region9
  $region8: #{output_block.1} parent=0 // pred_region
    _
  $region9: #{output_block.1} parent=0 // pred_fallthru
    _
  // Predicated region
  $region10: #{output_block.1} parent=0 // pred_check
    _
  $region11: #{output_block.1} parent=0 // pred_check_branch
    %13 = sbr.rel (0) target = $region13
  $region12: #{output_block.1} parent=0 // pred_region
    _
  $region13: #{output_block.1} parent=0 // pred_fallthru
    _
  %v14 = vld [vmem:[%s2] sm:$0xff]
  %v15 = vld [vmem:[%s2 + $0x8] sm:$0xff]
  %v16 = vld [vmem:[%s2 + $0x10] sm:$0xff]
  %v17 = vld [vmem:[%s2 + $0x18] sm:$0xff]
  %v18 = vld [vmem:[%s2 + $0x20] sm:$0xff]
  %v19 = vld [vmem:[%s2 + $0x28] sm:$0xff]
  %v20 = vld [vmem:[%s2 + $0x30] sm:$0xff]
  %v21 = vld [vmem:[%s2 + $0x38] sm:$0xff]
  %v22 = vld [vmem:[%s2 + $0x40] sm:$0xff]
  %v23 = vld [vmem:[%s2 + $0x48] sm:$0xff]
  %v24 = vld [vmem:[%s2 + $0x50] sm:$0xff]
  %v25 = vld [vmem:[%s2 + $0x58] sm:$0xff]
  %v26 = vld [vmem:[%s2 + $0x60] sm:$0xff]
  %v27 = vld [vmem:[%s2 + $0x70] sm:$0xff]
  %v28 = vld [vmem:[%s0] sm:$0xff]
  %v29 = vld [vmem:[%s0 + $0x8] sm:$0xff]
  %v30 = vld [vmem:[%s0 + $0x10] sm:$0x1f]
  %v31 = vld [vmem:[%s0 + $0x18] sm:$0x1f]
  %vm32 = vcmask 105472
  %v34 = vsel %vm32, %v26, 0
  %v37 = vsel %vm32, %v27, 0
  %vm39 = vcmask 1044480
  %v41 = vsel %vm39, %v30, 0
  %v44 = vsel %vm39, %v31, 0
  %46 = vmatprep.subr.mxu0 %v29
  %47 = vmatpush1.msra.mxu0 %v28
  %48 = vmatprep.subr.mxu0 %v44
  %49 = vmatpush1.msra.mxu0 %v41
  %50 = vmatprep.subr.mxu0 0.0
  %51 = vmatpush1.msra.mxu0 0.0
  %52 = vmatprep.subr.mxu0 0.0
  %53 = vmatpush1.msra.mxu0 0.0
  %54 = vmatprep.subr.mxu0 0.0
  %55 = vmatpush1.msra.mxu0 0.0
  %56 = vmatprep.subr.mxu0 0.0
  %57 = vmatpush1.msra.mxu0 0.0
  %58 = vmatprep.subr.mxu0 0.0
  %59 = vmatpush1.msra.mxu0 0.0
  %60 = vmatprep.subr.mxu0 0.0
  %61 = vmatpush1.msra.mxu0 0.0
  %62 = vmatprep.subr.mxu0 0.0
  %63 = vmatpush1.msra.mxu0 0.0
  %64 = vmatprep.subr.mxu0 0.0
  %65 = vmatpush1.msra.mxu0 0.0
  %66 = vmatprep.subr.mxu0 0.0
  %67 = vmatpush1.msra.mxu0 0.0
  %68 = vmatprep.subr.mxu0 0.0
  %69 = vmatpush1.msra.mxu0 0.0
  %70 = vmatprep.subr.mxu0 0.0
  %71 = vmatpush1.msra.mxu0 0.0
  %72 = vmatprep.subr.mxu0 0.0
  %73 = vmatpush1.msra.mxu0 0.0
  %74 = vmatprep.subr.mxu0 0.0
  %75 = vmatpush1.msra.mxu0 0.0
  %76 = vmatprep.subr.mxu0 0.0
  %77 = vmatpush1.msra.mxu0 0.0
  %78 = vmatprep.subr.mxu0 0.0
  %79 = vmatpush1.msra.mxu0 0.0
  %80 = vmatprep.subr.mxu0 0.0
  %81 = vmatpush1.msra.mxu0 0.0
  %82 = vmatprep.subr.mxu0 0.0
  %83 = vmatpush1.msra.mxu0 0.0
  %84 = vmatprep.subr.mxu0 0.0
  %85 = vmatpush1.msra.mxu0 0.0
  %86 = vmatprep.subr.mxu0 0.0
  %87 = vmatpush1.msra.mxu0 0.0
  %88 = vmatprep.subr.mxu0 0.0
  %89 = vmatpush1.msra.mxu0 0.0
  %90 = vmatprep.subr.mxu0 0.0
  %91 = vmatpush1.msra.mxu0 0.0
  %92 = vmatprep.subr.mxu0 0.0
  %93 = vmatpush1.msra.mxu0 0.0
  %94 = vmatprep.subr.mxu0 0.0
  %95 = vmatpush1.msra.mxu0 0.0
  %96 = vmatprep.subr.mxu0 0.0
  %97 = vmatpush1.msra.mxu0 0.0
  %98 = vmatprep.subr.mxu0 0.0
  %99 = vmatpush1.msra.mxu0 0.0
  %100 = vmatprep.subr.mxu0 0.0
  %101 = vmatpush1.msra.mxu0 0.0
  %102 = vmatprep.subr.mxu0 0.0
  %103 = vmatpush1.msra.mxu0 0.0
  %104 = vmatprep.subr.mxu0 0.0
  %105 = vmatpush1.msra.mxu0 0.0
  %106 = vmatprep.subr.mxu0 0.0
  %107 = vmatpush1.msra.mxu0 0.0
  %108 = vmatprep.subr.mxu0 0.0
  %109 = vmatpush1.msra.mxu0 0.0
  %110 = vmatprep.mubr.f32.mxu0 0.0
  %111 = vmatmul.mubr.f32.gmra.mrb[0].mxu0 %v34
  %v112 = vpop.f32.mrb[0].mxu0
  %v113 = vadd.f32 0.0, %v112
  %v114 = vpop.f32.mrb[0].mxu0
  %v115 = vadd.f32 0.0, %v114
  %116 = vmatprep.mubr.f32.mxu0 0.0
  %117 = vmatmul.mubr.f32.gmra.mrb[0].mxu0 %v37
  %v118 = vpop.f32.mrb[0].mxu0
  %v119 = vadd.f32 0.0, %v118
  %v120 = vpop.f32.mrb[0].mxu0
  %v121 = vadd.f32 0.0, %v120
  %122 = vdwg.mxu0
  %v123 = vxor.u32 %v119, 2147483648
  %v124 = vxor.u32 %v121, 2147483648
  %v125 = vmul.f32 %v123, 1.442695
  %v126 = vpow.pop %v125
  %v127 = vmul.f32 %v124, 1.442695
  %v128 = vpow.pop %v127
  %v129 = vadd.f32 %v126, 1.0
  %v130 = vadd.f32 %v128, 1.0
  %v131 = vrcp.pop %v129
  %v132 = vmul.f32 1.0, %v131
  %v133 = vrcp.pop %v130
  %v134 = vmul.f32 1.0, %v133
  %v135 = vmul.f32 %v113, %v132
  %v136 = vmul.f32 %v115, %v134
  %v137 = vmul.f32 %v135, %v135
  %v138 = vmul.f32 %v136, %v136
  %v139 = vld [vmem:[%s1] sm:$0xff]
  %v140 = vld [vmem:[%s1 + $0x8] sm:$0xff]
  %v141 = vld [vmem:[%s1 + $0x10] sm:$0xff]
  %v142 = vld [vmem:[%s1 + $0x18] sm:$0xff]
  %v143 = vld [vmem:[%s1 + $0x20] sm:$0xff]
  %v144 = vld [vmem:[%s1 + $0x28] sm:$0xff]
  %v145 = vld [vmem:[%s1 + $0x30] sm:$0xff]
  %v146 = vld [vmem:[%s1 + $0x38] sm:$0xff]
  %v147 = vld [vmem:[%s1 + $0x40] sm:$0xff]
  %v148 = vld [vmem:[%s1 + $0x48] sm:$0xff]
  %v149 = vld [vmem:[%s1 + $0x50] sm:$0xff]
  %v150 = vld [vmem:[%s1 + $0x58] sm:$0xff]
  %v151 = vld [vmem:[%s1 + $0x60] sm:$0xff]
  %v152 = vld [vmem:[%s1 + $0x68] sm:$0xff]
  %v153 = vld [vmem:[%s1 + $0x70] sm:$0xff]
  %v154 = vld [vmem:[%s1 + $0x78] sm:$0xff]
  %v155 = vld [vmem:[%s1 + $0x80] sm:$0xff]
  %v156 = vld [vmem:[%s1 + $0x88] sm:$0xff]
  %v157 = vld [vmem:[%s1 + $0x90] sm:$0xff]
  %v158 = vld [vmem:[%s1 + $0x98] sm:$0xff]
  %v159 = vld [vmem:[%s1 + $0xa0] sm:$0xff]
  %v160 = vld [vmem:[%s1 + $0xa8] sm:$0xff]
  %v161 = vld [vmem:[%s1 + $0xb0] sm:$0xff]
  %v162 = vld [vmem:[%s1 + $0xb8] sm:$0xff]
  %vm163 = vcmask 523264
  %v165 = vsel %vm163, %v136, 0
  %v168 = vsel %vm163, %v138, 0
  %170 = vmatprep.subr.mxu0 0.0
  %171 = vmatpush1.msra.mxu0 %v139
  %172 = vmatprep.subr.mxu0 0.0
  %173 = vmatpush1.msra.mxu0 %v140
  %174 = vmatprep.subr.mxu0 0.0
  %175 = vmatpush1.msra.mxu0 %v141
  %176 = vmatprep.subr.mxu0 0.0
  %177 = vmatpush1.msra.mxu0 %v142
  %178 = vmatprep.subr.mxu0 0.0
  %179 = vmatpush1.msra.mxu0 %v143
  %180 = vmatprep.subr.mxu0 0.0
  %181 = vmatpush1.msra.mxu0 %v144
  %182 = vmatprep.subr.mxu0 0.0
  %183 = vmatpush1.msra.mxu0 %v145
  %184 = vmatprep.subr.mxu0 0.0
  %185 = vmatpush1.msra.mxu0 %v146
  %186 = vmatprep.subr.mxu0 0.0
  %187 = vmatpush1.msra.mxu0 %v147
  %188 = vmatprep.subr.mxu0 0.0
  %189 = vmatpush1.msra.mxu0 %v148
  %190 = vmatprep.subr.mxu0 0.0
  %191 = vmatpush1.msra.mxu0 %v149
  %192 = vmatprep.subr.mxu0 0.0
  %193 = vmatpush1.msra.mxu0 %v150
  %194 = vmatprep.subr.mxu0 0.0
  %195 = vmatpush1.msra.mxu0 %v151
  %196 = vmatprep.subr.mxu0 0.0
  %197 = vmatpush1.msra.mxu0 %v152
  %198 = vmatprep.subr.mxu0 0.0
  %199 = vmatpush1.msra.mxu0 %v153
  %200 = vmatprep.subr.mxu0 0.0
  %201 = vmatpush1.msra.mxu0 %v154
  %202 = vmatprep.subr.mxu0 0.0
  %203 = vmatpush1.msra.mxu0 %v155
  %204 = vmatprep.subr.mxu0 0.0
  %205 = vmatpush1.msra.mxu0 %v156
  %206 = vmatprep.subr.mxu0 0.0
  %207 = vmatpush1.msra.mxu0 %v157
  %208 = vmatprep.subr.mxu0 0.0
  %209 = vmatpush1.msra.mxu0 %v158
  %210 = vmatprep.subr.mxu0 0.0
  %211 = vmatpush1.msra.mxu0 %v159
  %212 = vmatprep.subr.mxu0 0.0
  %213 = vmatpush1.msra.mxu0 %v160
  %214 = vmatprep.subr.mxu0 0.0
  %215 = vmatpush1.msra.mxu0 %v161
  %216 = vmatprep.subr.mxu0 0.0
  %217 = vmatpush1.msra.mxu0 %v162
  %218 = vmatprep.subr.mxu0 0.0
  %219 = vmatpush1.msra.mxu0 0.0
  %220 = vmatprep.subr.mxu0 0.0
  %221 = vmatpush1.msra.mxu0 0.0
  %222 = vmatprep.subr.mxu0 0.0
  %223 = vmatpush1.msra.mxu0 0.0
  %224 = vmatprep.subr.mxu0 0.0
  %225 = vmatpush1.msra.mxu0 0.0
  %226 = vmatprep.subr.mxu0 0.0
  %227 = vmatpush1.msra.mxu0 0.0
  %228 = vmatprep.subr.mxu0 0.0
  %229 = vmatpush1.msra.mxu0 0.0
  %230 = vmatprep.subr.mxu0 0.0
  %231 = vmatpush1.msra.mxu0 0.0
  %232 = vmatprep.subr.mxu0 0.0
  %233 = vmatpush1.msra.mxu0 0.0
  %234 = vmatprep.mubr.f32.mxu0 %v165
  %235 = vmatmul.mubr.f32.gmra.mrb[0].mxu0 %v135
  %v236 = vpop.f32.mrb[0].mxu0
  %v237 = vadd.f32 0.0, %v236
  %v238 = vpop.f32.mrb[0].mxu0
  %239 = vmatprep.mubr.f32.mxu0 %v168
  %240 = vmatmul.mubr.f32.gmra.mrb[0].mxu0 %v137
  %v241 = vpop.f32.mrb[0].mxu0
  %v242 = vadd.f32 0.0, %v241
  %v243 = vpop.f32.mrb[0].mxu0
  %244 = vdwg.mxu0
  %vm245 = vcmask 97280
  %v246 = vsel %vm245, %v237, 0.0
  %v247 = vrot.slane %v246, 4
  %v248 = vadd.f32 %v246, %v247
  %v249 = vrot.slane %v248, 2
  %v250 = vadd.f32 %v248, %v249
  %v251 = vrot.slane %v250, 1
  %v252 = vadd.f32 %v250, %v251
  %v253 = vmul.f32 %v252, 0.0078125
  %v254 = vsel %vm245, %v242, 0.0
  %v255 = vrot.slane %v254, 4
  %v256 = vadd.f32 %v254, %v255
  %v257 = vrot.slane %v256, 2
  %v258 = vadd.f32 %v256, %v257
  %v259 = vrot.slane %v258, 1
  %v260 = vadd.f32 %v258, %v259
  %v261 = vmul.f32 %v260, 0.0078125
  %v262 = vmul.f32 %v253, %v253
  %v263 = vsub.f32 %v261, %v262
  %v264 = vadd.f32 %v263, 1e-12
  %v265 = vrsqrt.pop %v264
  %vm266 = vcmask 1040384
  %v267 = vsel %vm266, %v253, %v265
  %v269 = vsel %vm245, %v267, 0
  %vm271 = vcmask 1043456
  %v273 = vsel %vm271, %v24, 0
  %v276 = vsel %vm271, %v25, 0
  %278 = vmatprep.subr.mxu0 %v23
  %279 = vmatpush1.msra.mxu0 %v22
  %280 = vmatprep.subr.mxu0 %v276
  %281 = vmatpush1.msra.mxu0 %v273
  %282 = vmatprep.subr.mxu0 0.0
  %283 = vmatpush1.msra.mxu0 0.0
  %284 = vmatprep.subr.mxu0 0.0
  %285 = vmatpush1.msra.mxu0 0.0
  %286 = vmatprep.subr.mxu0 0.0
  %287 = vmatpush1.msra.mxu0 0.0
  %288 = vmatprep.subr.mxu0 0.0
  %289 = vmatpush1.msra.mxu0 0.0
  %290 = vmatprep.subr.mxu0 0.0
  %291 = vmatpush1.msra.mxu0 0.0
  %292 = vmatprep.subr.mxu0 0.0
  %293 = vmatpush1.msra.mxu0 0.0
  %294 = vmatprep.subr.mxu0 0.0
  %295 = vmatpush1.msra.mxu0 0.0
  %296 = vmatprep.subr.mxu0 0.0
  %297 = vmatpush1.msra.mxu0 0.0
  %298 = vmatprep.subr.mxu0 0.0
  %299 = vmatpush1.msra.mxu0 0.0
  %300 = vmatprep.subr.mxu0 0.0
  %301 = vmatpush1.msra.mxu0 0.0
  %302 = vmatprep.subr.mxu0 0.0
  %303 = vmatpush1.msra.mxu0 0.0
  %304 = vmatprep.subr.mxu0 0.0
  %305 = vmatpush1.msra.mxu0 0.0
  %306 = vmatprep.subr.mxu0 0.0
  %307 = vmatpush1.msra.mxu0 0.0
  %308 = vmatprep.subr.mxu0 0.0
  %309 = vmatpush1.msra.mxu0 0.0
  %310 = vmatprep.subr.mxu0 0.0
  %311 = vmatpush1.msra.mxu0 0.0
  %312 = vmatprep.subr.mxu0 0.0
  %313 = vmatpush1.msra.mxu0 0.0
  %314 = vmatprep.subr.mxu0 0.0
  %315 = vmatpush1.msra.mxu0 0.0
  %316 = vmatprep.subr.mxu0 0.0
  %317 = vmatpush1.msra.mxu0 0.0
  %318 = vmatprep.subr.mxu0 0.0
  %319 = vmatpush1.msra.mxu0 0.0
  %320 = vmatprep.subr.mxu0 0.0
  %321 = vmatpush1.msra.mxu0 0.0
  %322 = vmatprep.subr.mxu0 0.0
  %323 = vmatpush1.msra.mxu0 0.0
  %324 = vmatprep.subr.mxu0 0.0
  %325 = vmatpush1.msra.mxu0 0.0
  %326 = vmatprep.subr.mxu0 0.0
  %327 = vmatpush1.msra.mxu0 0.0
  %328 = vmatprep.subr.mxu0 0.0
  %329 = vmatpush1.msra.mxu0 0.0
  %330 = vmatprep.subr.mxu0 0.0
  %331 = vmatpush1.msra.mxu0 0.0
  %332 = vmatprep.subr.mxu0 0.0
  %333 = vmatpush1.msra.mxu0 0.0
  %334 = vmatprep.subr.mxu0 0.0
  %335 = vmatpush1.msra.mxu0 0.0
  %336 = vmatprep.subr.mxu0 0.0
  %337 = vmatpush1.msra.mxu0 0.0
  %338 = vmatprep.subr.mxu0 0.0
  %339 = vmatpush1.msra.mxu0 0.0
  %340 = vmatprep.subr.mxu0 0.0
  %341 = vmatpush1.msra.mxu0 0.0
  %342 = vmatprep.mubr.f32.mxu0 0.0
  %343 = vmatmul.mubr.f32.gmra.mrb[0].mxu0 %v269
  %v344 = vpop.f32.mrb[0].mxu0
  %v345 = vadd.f32 0.0, %v344
  %v346 = vpop.f32.mrb[0].mxu0
  %v347 = vadd.f32 0.0, %v346
  %348 = vdwg.mxu0
  %v349 = vlaneseq
  %v350 = vshrl.u32 %v349, 7
  %v351 = vsub.s32 0, %v350
  %v352 = vrot.slane %v345, %v351
  %v353 = vlaneseq
  %v354 = vshrl.u32 %v353, 7
  %v355 = vsub.s32 0, %v354
  %v356 = vrot.slane %v347, %v355
  %v357 = vsub.f32 %v135, %v352
  %v358 = vsub.f32 %v136, %v356
  %v359 = vlaneseq
  %v360 = vshrl.u32 %v359, 7
  %v361 = vsub.s32 1, %v360
  %v362 = vrot.slane %v345, %v361
  %v363 = vlaneseq
  %v364 = vshrl.u32 %v363, 7
  %v365 = vsub.s32 1, %v364
  %v366 = vrot.slane %v347, %v365
  %v367 = vmul.f32 %v357, %v362
  %v368 = vmul.f32 %v358, %v366
  %v369 = vmul.f32 %v367, %v14
  %v370 = vmul.f32 %v368, %v15
  %v371 = vadd.f32 %v369, %v16
  %v372 = vadd.f32 %v370, %v17
  %373 = vrot.lane.b32.xlu0 %v26, 115
  %v374 = vpop.permute.xlu0 %373
  %375 = vrot.lane.b32.xlu0 %v27, 115
  %v376 = vpop.permute.xlu0 %375
  %vm377 = vcmask 64512
  %v378 = vsel %vm377, %v374, 0
  %v380 = vsel %vm377, %v376, 0
  %382 = vmatprep.subr.mxu0 %v372
  %383 = vmatpush1.msra.mxu0 %v371
  %384 = vmatprep.subr.mxu0 0.0
  %385 = vmatpush1.msra.mxu0 0.0
  %386 = vmatprep.subr.mxu0 0.0
  %387 = vmatpush1.msra.mxu0 0.0
  %388 = vmatprep.subr.mxu0 0.0
  %389 = vmatpush1.msra.mxu0 0.0
  %390 = vmatprep.subr.mxu0 0.0
  %391 = vmatpush1.msra.mxu0 0.0
  %392 = vmatprep.subr.mxu0 0.0
  %393 = vmatpush1.msra.mxu0 0.0
  %394 = vmatprep.subr.mxu0 0.0
  %395 = vmatpush1.msra.mxu0 0.0
  %396 = vmatprep.subr.mxu0 0.0
  %397 = vmatpush1.msra.mxu0 0.0
  %398 = vmatprep.subr.mxu0 0.0
  %399 = vmatpush1.msra.mxu0 0.0
  %400 = vmatprep.subr.mxu0 0.0
  %401 = vmatpush1.msra.mxu0 0.0
  %402 = vmatprep.subr.mxu0 0.0
  %403 = vmatpush1.msra.mxu0 0.0
  %404 = vmatprep.subr.mxu0 0.0
  %405 = vmatpush1.msra.mxu0 0.0
  %406 = vmatprep.subr.mxu0 0.0
  %407 = vmatpush1.msra.mxu0 0.0
  %408 = vmatprep.subr.mxu0 0.0
  %409 = vmatpush1.msra.mxu0 0.0
  %410 = vmatprep.subr.mxu0 0.0
  %411 = vmatpush1.msra.mxu0 0.0
  %412 = vmatprep.subr.mxu0 0.0
  %413 = vmatpush1.msra.mxu0 0.0
  %414 = vmatprep.subr.mxu0 0.0
  %415 = vmatpush1.msra.mxu0 0.0
  %416 = vmatprep.subr.mxu0 0.0
  %417 = vmatpush1.msra.mxu0 0.0
  %418 = vmatprep.subr.mxu0 0.0
  %419 = vmatpush1.msra.mxu0 0.0
  %420 = vmatprep.subr.mxu0 0.0
  %421 = vmatpush1.msra.mxu0 0.0
  %422 = vmatprep.subr.mxu0 0.0
  %423 = vmatpush1.msra.mxu0 0.0
  %424 = vmatprep.subr.mxu0 0.0
  %425 = vmatpush1.msra.mxu0 0.0
  %426 = vmatprep.subr.mxu0 0.0
  %427 = vmatpush1.msra.mxu0 0.0
  %428 = vmatprep.subr.mxu0 0.0
  %429 = vmatpush1.msra.mxu0 0.0
  %430 = vmatprep.subr.mxu0 0.0
  %431 = vmatpush1.msra.mxu0 0.0
  %432 = vmatprep.subr.mxu0 0.0
  %433 = vmatpush1.msra.mxu0 0.0
  %434 = vmatprep.subr.mxu0 0.0
  %435 = vmatpush1.msra.mxu0 0.0
  %436 = vmatprep.subr.mxu0 0.0
  %437 = vmatpush1.msra.mxu0 0.0
  %438 = vmatprep.subr.mxu0 0.0
  %439 = vmatpush1.msra.mxu0 0.0
  %440 = vmatprep.subr.mxu0 0.0
  %441 = vmatpush1.msra.mxu0 0.0
  %442 = vmatprep.subr.mxu0 0.0
  %443 = vmatpush1.msra.mxu0 0.0
  %444 = vmatprep.subr.mxu0 0.0
  %445 = vmatpush1.msra.mxu0 0.0
  %446 = vmatprep.mubr.f32.mxu0 0.0
  %447 = vmatmul.mubr.f32.gmra.mrb[0].mxu0 %v378
  %v448 = vpop.f32.mrb[0].mxu0
  %v449 = vadd.f32 %v18, %v448
  %v450 = vpop.f32.mrb[0].mxu0
  %v451 = vadd.f32 %v19, %v450
  %452 = vmatprep.mubr.f32.mxu0 0.0
  %453 = vmatmul.mubr.f32.gmra.mrb[0].mxu0 %v380
  %v454 = vpop.f32.mrb[0].mxu0
  %v455 = vadd.f32 %v20, %v454
  %v456 = vpop.f32.mrb[0].mxu0
  %v457 = vadd.f32 %v21, %v456
  %458 = vdwg.mxu0
  %v459 = vmax.f32 %v449, 0.0
  %v460 = vmax.f32 %v451, 0.0
  %v461 = vmax.f32 %v455, 0.0
  %v462 = vmax.f32 %v457, 0.0
  %v463 = vrot.slane %v24, 6
  %v464 = vrot.slane %v24, 4
  %v465 = vrot.slane %v25, 4
  %vm468 = vcmask 130048
  %v469 = vsel %vm468, %v463, 0
  %471 = vmatprep.subr.mxu0 %v460
  %472 = vmatpush1.msra.mxu0 %v459
  %473 = vmatprep.subr.mxu0 %v462
  %474 = vmatpush1.msra.mxu0 %v461
  %475 = vmatprep.subr.mxu0 0.0
  %476 = vmatpush1.msra.mxu0 0.0
  %477 = vmatprep.subr.mxu0 0.0
  %478 = vmatpush1.msra.mxu0 0.0
  %479 = vmatprep.subr.mxu0 0.0
  %480 = vmatpush1.msra.mxu0 0.0
  %481 = vmatprep.subr.mxu0 0.0
  %482 = vmatpush1.msra.mxu0 0.0
  %483 = vmatprep.subr.mxu0 0.0
  %484 = vmatpush1.msra.mxu0 0.0
  %485 = vmatprep.subr.mxu0 0.0
  %486 = vmatpush1.msra.mxu0 0.0
  %487 = vmatprep.subr.mxu0 0.0
  %488 = vmatpush1.msra.mxu0 0.0
  %489 = vmatprep.subr.mxu0 0.0
  %490 = vmatpush1.msra.mxu0 0.0
  %491 = vmatprep.subr.mxu0 0.0
  %492 = vmatpush1.msra.mxu0 0.0
  %493 = vmatprep.subr.mxu0 0.0
  %494 = vmatpush1.msra.mxu0 0.0
  %495 = vmatprep.subr.mxu0 0.0
  %496 = vmatpush1.msra.mxu0 0.0
  %497 = vmatprep.subr.mxu0 0.0
  %498 = vmatpush1.msra.mxu0 0.0
  %499 = vmatprep.subr.mxu0 0.0
  %500 = vmatpush1.msra.mxu0 0.0
  %501 = vmatprep.subr.mxu0 0.0
  %502 = vmatpush1.msra.mxu0 0.0
  %503 = vmatprep.subr.mxu0 0.0
  %504 = vmatpush1.msra.mxu0 0.0
  %505 = vmatprep.subr.mxu0 0.0
  %506 = vmatpush1.msra.mxu0 0.0
  %507 = vmatprep.subr.mxu0 0.0
  %508 = vmatpush1.msra.mxu0 0.0
  %509 = vmatprep.subr.mxu0 0.0
  %510 = vmatpush1.msra.mxu0 0.0
  %511 = vmatprep.subr.mxu0 0.0
  %512 = vmatpush1.msra.mxu0 0.0
  %513 = vmatprep.subr.mxu0 0.0
  %514 = vmatpush1.msra.mxu0 0.0
  %515 = vmatprep.subr.mxu0 0.0
  %516 = vmatpush1.msra.mxu0 0.0
  %517 = vmatprep.subr.mxu0 0.0
  %518 = vmatpush1.msra.mxu0 0.0
  %519 = vmatprep.subr.mxu0 0.0
  %520 = vmatpush1.msra.mxu0 0.0
  %521 = vmatprep.subr.mxu0 0.0
  %522 = vmatpush1.msra.mxu0 0.0
  %523 = vmatprep.subr.mxu0 0.0
  %524 = vmatpush1.msra.mxu0 0.0
  %525 = vmatprep.subr.mxu0 0.0
  %526 = vmatpush1.msra.mxu0 0.0
  %527 = vmatprep.subr.mxu0 0.0
  %528 = vmatpush1.msra.mxu0 0.0
  %529 = vmatprep.subr.mxu0 0.0
  %530 = vmatpush1.msra.mxu0 0.0
  %531 = vmatprep.subr.mxu0 0.0
  %532 = vmatpush1.msra.mxu0 0.0
  %533 = vmatprep.subr.mxu0 0.0
  %534 = vmatpush1.msra.mxu0 0.0
  %535 = vmatprep.mubr.f32.mxu0 0.0
  %536 = vmatmul.mubr.f32.gmra.mrb[0].mxu0 %v469
  %v537 = vpop.f32.mrb[0].mxu0
  %v538 = vadd.f32 %v464, %v537
  %v539 = vpop.f32.mrb[0].mxu0
  %v540 = vadd.f32 %v465, %v539
  %541 = vdwg.mxu0
  %v544 = vcombine.low %v538, %v540
  %v546 = vunpack.c.l.s4 1983009808
  %v547 = vunpack.c.0.s8 %v546
  %v548 = vlaneseq
  %v549 = vshrl.u32 %v548, 7
  %v550 = vsub.s32 %v547, %v549
  %v551 = vrot.slane %v544, %v550
  %vm553 = vcmask 1041408
  %vm554 = vcmask 519170
  %vm555 = vmor %vm554, %vm553
  %556 = vst.msk [vmem:[%s3] sm:$0xf] %vm555, %v551
  // Predicated region
  $region14: #{output_block.1} parent=0 // pred_check
    _
  $region15: #{output_block.1} parent=0 // pred_check_branch
    %558 = sbr.rel (0) target = $region17
  $region16: #{output_block.1} parent=0 // pred_region
    _
  $region17: #{output_block.1} parent=0 // pred_fallthru
    _
  // Predicated region
  $region18: #{output_block.1} parent=0 // pred_check
    _
  $region19: #{output_block.1} parent=0 // pred_check_branch
    %560 = sbr.rel (0) target = $region21
  $region20: #{output_block.1} parent=0 // pred_region
    _
  $region21: #{output_block.1} parent=0 // pred_fallthru
    _

</llo_original>
